<compile_context>
chip_gen: v7x
topology: tpu7x:2x2x1
jax: 0.10.0
libtpu: 0.0.40
codegen_flags: <defaults>
</compile_context>

<pallas_src>
import jax
import jax.numpy as jnp
import numpy as np
from jax import lax
from jax.experimental import pallas as pl
from jax.experimental.pallas import tpu as pltpu

_LN_EPS = 1e-5
_NORM_EPS_SQ = 1e-24                      # (F.normalize eps 1e-12)^2, clamped under rsqrt
_VMEM_LIMIT_BYTES = 56 * 1024 * 1024      # <= v7x 64 MiB physical, > v5e/v6e defaults
_SINGLE_PASS_VMEM_BUDGET = 40 * 1024 * 1024


def _layernorm_cf(x_f32, lnw, lnb):
    """WithBias LayerNorm over channels (sublanes), per token (lane). f32 math."""
    mu = jnp.mean(x_f32, axis=0, keepdims=True)
    xc = x_f32 - mu
    var = jnp.mean(xc * xc, axis=0, keepdims=True)
    return xc * lax.rsqrt(var + _LN_EPS) * lnw + lnb


# ---------------------------------------------------------------------------
# Single-pass fused kernel: whole (C, N) slab per batch element, Bt per step.
# ---------------------------------------------------------------------------
def _make_fused_kernel(bt, c, matmul_dtype):
    use_approx = (matmul_dtype != jnp.float32)

    def kernel(x_ref, lnw_ref, lnb_ref, wqkv_ref, wout_ref, sigma_ref, o_ref):
        lnw = lnw_ref[...]
        lnb = lnb_ref[...]
        wqkv = wqkv_ref[...]
        wout = wout_ref[...]
        sig = sigma_ref[0, 0]

        # Unrolled loop over the batch tile amortizes the fixed per-grid-step
        # cost; each iteration is the full channels-first (C, N) pipeline.
        for bi in range(bt):
            x = x_ref[bi].astype(jnp.float32)                       # (C, N)
            y = _layernorm_cf(x, lnw, lnb)
            y_mm = y.astype(matmul_dtype)

            # Fused conv1 (1x1) + qkv projection: (3C, C) @ (C, N).
            if c % 8 == 0:
                qkv = jnp.dot(wqkv, y_mm, preferred_element_type=jnp.float32)
                q, k, v = qkv[0:c], qkv[c:2 * c], qkv[2 * c:3 * c]
            else:
                # Sublane-alignment guard: slicing the (3C, N) result at rows
                # that are not multiples of 8 would force VMEM relayout copies.
                q = jnp.dot(wqkv[0:c], y_mm, preferred_element_type=jnp.float32)
                k = jnp.dot(wqkv[c:2 * c], y_mm, preferred_element_type=jnp.float32)
                v = jnp.dot(wqkv[2 * c:3 * c], y_mm, preferred_element_type=jnp.float32)

            # Token-axis L2 normalization of q/k, folded (with sigma) into a
            # single (C, C) post-scale of the logits (rsqrt -> EUP slot).
            inv_qn = lax.rsqrt(jnp.maximum(
                jnp.sum(q * q, axis=1, keepdims=True), _NORM_EPS_SQ))   # (C, 1)
            inv_kn = lax.rsqrt(jnp.maximum(
                jnp.sum(k * k, axis=1, keepdims=True), _NORM_EPS_SQ))   # (C, 1)

            # Gram over tokens: attn[c, d] = sum_n k[c, n] q[d, n]  (MXU, K = N).
            attn = lax.dot_general(k.astype(matmul_dtype), q.astype(matmul_dtype),
                                   (((1,), (1,)), ((), ())),
                                   preferred_element_type=jnp.float32)  # (C, C)
            attn = attn * (sig * inv_kn * inv_qn.T)

            # Softmax over the last dim.  No max-subtraction: q/k are
            # L2-normalized so |logits| <= |sigma| (re-add it if sigma could
            # ever be trained to ~80+).
            p = jnp.exp(attn)
            den = jnp.sum(p, axis=-1, keepdims=True)
            if use_approx:
                attn = p * pl.reciprocal(den, approx=True)
            else:
                attn = p / den

            # out[d, n] = sum_c attn[c, d] v[c, n]  (= attn^T @ v).
            out = lax.dot_general(attn.astype(matmul_dtype), v.astype(matmul_dtype),
                                  (((0,), (0,)), ((), ())),
                                  preferred_element_type=jnp.float32)   # (C, N)

            # Fused linear + conv2 (1x1): (C, C) @ (C, N), then residual.
            out = jnp.dot(wout, out.astype(matmul_dtype),
                          preferred_element_type=jnp.float32)
            o_ref[bi] = (out + x).astype(o_ref.dtype)

    return kernel


def _fused_pallas_call(x_cf, lnw, lnb, wqkv_mm, wout_mm, sigma, *, bt, matmul_dtype):
    b, c, n = x_cf.shape
    return pl.pallas_call(
        _make_fused_kernel(bt, c, matmul_dtype),
        out_shape=jax.ShapeDtypeStruct((b, c, n), x_cf.dtype),
        grid_spec=pltpu.PrefetchScalarGridSpec(
            num_scalar_prefetch=0,
            grid=(b // bt,),
            in_specs=[
                pl.BlockSpec((bt, c, n), lambda i: (i, 0, 0)),       # x (channels-first)
                pl.BlockSpec((c, 1), lambda i: (0, 0)),              # LN weight
                pl.BlockSpec((c, 1), lambda i: (0, 0)),              # LN bias
                pl.BlockSpec((3 * c, c), lambda i: (0, 0)),          # fused conv1+qkv
                pl.BlockSpec((c, c), lambda i: (0, 0)),              # fused linear+conv2
                pl.BlockSpec(memory_space=pltpu.MemorySpace.SMEM),   # sigma scalar
            ],
            out_specs=pl.BlockSpec((bt, c, n), lambda i: (i, 0, 0)),
        ),
        compiler_params=pltpu.CompilerParams(
            dimension_semantics=("parallel",),
            vmem_limit_bytes=_VMEM_LIMIT_BYTES),
    )(x_cf, lnw, lnb, wqkv_mm, wout_mm, sigma)


# ---------------------------------------------------------------------------
# N-tiled two-pass path (for large H*W, sized for v7x's 64 MiB VMEM).
# ---------------------------------------------------------------------------
def _make_stats_kernel(c, matmul_dtype):
    def kernel(x_ref, lnw_ref, lnb_ref, wqk_ref, gram_ref, ssq_ref, ssk_ref):
        t = pl.program_id(1)
        x = x_ref[0].astype(jnp.float32)                             # (C, tn)
        y = _layernorm_cf(x, lnw_ref[...], lnb_ref[...]).astype(matmul_dtype)
        wqk = wqk_ref[...]
        if c % 8 == 0:
            qk = jnp.dot(wqk, y, preferred_element_type=jnp.float32)  # (2C, tn)
            q, k = qk[0:c], qk[c:2 * c]
        else:
            q = jnp.dot(wqk[0:c], y, preferred_element_type=jnp.float32)
            k = jnp.dot(wqk[c:2 * c], y, preferred_element_type=jnp.float32)

        gram_t = lax.dot_general(k.astype(matmul_dtype), q.astype(matmul_dtype),
                                 (((1,), (1,)), ((), ())),
                                 preferred_element_type=jnp.float32)  # (C, C)
        ssq_t = jnp.sum(q * q, axis=1, keepdims=True)                 # (C, 1)
        ssk_t = jnp.sum(k * k, axis=1, keepdims=True)                 # (C, 1)

        @pl.when(t == 0)
        def _():
            gram_ref[...] = jnp.zeros_like(gram_ref)
            ssq_ref[...] = jnp.zeros_like(ssq_ref)
            ssk_ref[...] = jnp.zeros_like(ssk_ref)

        gram_ref[0] += gram_t
        ssq_ref[0] += ssq_t
        ssk_ref[0] += ssk_t

    return kernel


def _make_apply_kernel(matmul_dtype):
    def kernel(x_ref, lnw_ref, lnb_ref, m_ref, o_ref):
        x = x_ref[0].astype(jnp.float32)                              # (C, tn)
        y = _layernorm_cf(x, lnw_ref[...], lnb_ref[...]).astype(matmul_dtype)
        out = jnp.dot(m_ref[0], y, preferred_element_type=jnp.float32)
        o_ref[0] = (out + x).astype(o_ref.dtype)
    return kernel


def _tiled_pallas_call(x_cf, lnw, lnb, wqkv_f32, wout_f32, sigma, *, n_tile, matmul_dtype):
    b, c, n = x_cf.shape
    nt = n // n_tile
    w_qk = wqkv_f32[:2 * c].astype(matmul_dtype)
    w_v = wqkv_f32[2 * c:]

    # Pass 1: accumulate per-batch (C, C) gram and q/k sum-of-squares over N tiles.
    gram, ssq, ssk = pl.pallas_call(
        _make_stats_kernel(c, matmul_dtype),
        out_shape=(jax.ShapeDtypeStruct((b, c, c), jnp.float32),
                   jax.ShapeDtypeStruct((b, c, 1), jnp.float32),
                   jax.ShapeDtypeStruct((b, c, 1), jnp.float32)),
        grid_spec=pltpu.PrefetchScalarGridSpec(
            num_scalar_prefetch=0,
            grid=(b, nt),
            in_specs=[
                pl.BlockSpec((1, c, n_tile), lambda bi, t: (bi, 0, t)),
                pl.BlockSpec((c, 1), lambda bi, t: (0, 0)),
                pl.BlockSpec((c, 1), lambda bi, t: (0, 0)),
                pl.BlockSpec((2 * c, c), lambda bi, t: (0, 0)),
            ],
            out_specs=(
                pl.BlockSpec((1, c, c), lambda bi, t: (bi, 0, 0)),
                pl.BlockSpec((1, c, 1), lambda bi, t: (bi, 0, 0)),
                pl.BlockSpec((1, c, 1), lambda bi, t: (bi, 0, 0)),
            ),
        ),
        compiler_params=pltpu.CompilerParams(
            dimension_semantics=("parallel", "arbitrary"),
            vmem_limit_bytes=_VMEM_LIMIT_BYTES),
    )(x_cf, lnw, lnb, w_qk)

    # Tiny per-batch glue in plain JAX ((B, C, C) sized): normalization scale,
    # softmax, and folding W_out @ attn^T @ W_v into a single (C, C) matrix M_b,
    # so pass 2 is one channel-mixing matmul per tile.
    inv_q = lax.rsqrt(jnp.maximum(ssq, _NORM_EPS_SQ))                 # (B, C, 1)
    inv_k = lax.rsqrt(jnp.maximum(ssk, _NORM_EPS_SQ))
    logits = gram * sigma.reshape(()) * inv_k * jnp.transpose(inv_q, (0, 2, 1))
    attn = jax.nn.softmax(logits, axis=-1)                            # (B, C, C)
    m = jnp.einsum("od,bcd,cj->boj", wout_f32, attn, w_v).astype(matmul_dtype)

    # Pass 2: out = M_b @ LayerNorm(x) + x, tile by tile.
    return pl.pallas_call(
        _make_apply_kernel(matmul_dtype),
        out_shape=jax.ShapeDtypeStruct((b, c, n), x_cf.dtype),
        grid_spec=pltpu.PrefetchScalarGridSpec(
            num_scalar_prefetch=0,
            grid=(b, nt),
            in_specs=[
                pl.BlockSpec((1, c, n_tile), lambda bi, t: (bi, 0, t)),
                pl.BlockSpec((c, 1), lambda bi, t: (0, 0)),
                pl.BlockSpec((c, 1), lambda bi, t: (0, 0)),
                pl.BlockSpec((1, c, c), lambda bi, t: (bi, 0, 0)),
            ],
            out_specs=pl.BlockSpec((1, c, n_tile), lambda bi, t: (bi, 0, t)),
        ),
        compiler_params=pltpu.CompilerParams(
            dimension_semantics=("parallel", "parallel"),
            vmem_limit_bytes=_VMEM_LIMIT_BYTES),
    )(x_cf, lnw, lnb, m)


# ---------------------------------------------------------------------------
# Wrapper
# ---------------------------------------------------------------------------
def _single_pass_vmem_bytes(bt, c, n, io_itemsize):
    io = 2 * 2 * bt * c * n * io_itemsize      # double-buffered x + out blocks
    tmp = 9 * bt * c * n * 4                   # live f32 (C, N) temporaries
    return io + tmp


def _default_batch_tile(b):
    if b <= 1:
        return 1
    bt = max(1, min(8, b // 2))   # amortize per-step cost but keep >= 2 parallel
    while b % bt:                 # grid steps so v7x's two TCs both get work
        bt -= 1
    return bt


def _auto_n_tile(c, n, io_itemsize):
    if n % 256:
        return None
    tn = n
    while (tn % 2 == 0 and (tn // 2) % 128 == 0 and tn // 2 >= 512
           and _single_pass_vmem_bytes(1, c, tn, io_itemsize) > _SINGLE_PASS_VMEM_BUDGET):
        tn //= 2
    return tn if tn < n else None


def spectral_attention_block(x_nchw, params, *, matmul_dtype=jnp.bfloat16,
                             batch_tile=None, n_tile=None):
    b, c, h, w = x_nchw.shape
    n = h * w
    x_cf = x_nchw.reshape(b, c, n)   # NCHW -> channels-first tokens (pure reshape)

    # One-time (C, C)-sized weight folding: conv1 into qkv, linear into conv2.
    w_qkv = (params["qkv_w"] @ params["conv1_w"]).astype(jnp.float32)    # (3C, C)
    w_out = (params["conv2_w"] @ params["lin_w"]).astype(jnp.float32)    # (C, C)
    lnw = params["ln_weight"].reshape(c, 1).astype(jnp.float32)
    lnb = params["ln_bias"].reshape(c, 1).astype(jnp.float32)
    sigma = params["sigma"].reshape(1, 1).astype(jnp.float32)

    io_itemsize = jnp.dtype(x_nchw.dtype).itemsize
    bt = batch_tile if batch_tile is not None else _default_batch_tile(b)
    bt = max(1, min(int(bt), b))
    while b % bt:
        bt -= 1

    if n_tile is None and _single_pass_vmem_bytes(bt, c, n, io_itemsize) > _SINGLE_PASS_VMEM_BUDGET:
        n_tile = _auto_n_tile(c, n, io_itemsize)

    if n_tile is not None and 0 < int(n_tile) < n and n % int(n_tile) == 0:
        out_cf = _tiled_pallas_call(x_cf, lnw, lnb, w_qkv, w_out, sigma,
                                    n_tile=int(n_tile), matmul_dtype=matmul_dtype)
    else:
        out_cf = _fused_pallas_call(x_cf, lnw, lnb,
                                    w_qkv.astype(matmul_dtype),
                                    w_out.astype(matmul_dtype),
                                    sigma, bt=bt, matmul_dtype=matmul_dtype)
    return out_cf.reshape(b, c, h, w)


# ---------------------------------------------------------------------------
# Pure-JAX reference matching the PyTorch forward semantics exactly.
# ---------------------------------------------------------------------------
def reference(x, p):
    b, c, h, w = x.shape
    n = h * w
    x3 = jnp.transpose(x.reshape(b, c, n), (0, 2, 1))                  # (b, n, c)
    mu = jnp.mean(x3, axis=-1, keepdims=True)
    var = jnp.mean((x3 - mu) ** 2, axis=-1, keepdims=True)
    y = (x3 - mu) / jnp.sqrt(var + 1e-5) * p["ln_weight"] + p["ln_bias"]
    y = y @ p["conv1_w"].T                                             # conv1 1x1
    qkv = y @ p["qkv_w"].T
    q, k, v = jnp.split(qkv, 3, axis=-1)
    qn = q / jnp.maximum(jnp.linalg.norm(q, axis=1, keepdims=True), 1e-12)
    kn = k / jnp.maximum(jnp.linalg.norm(k, axis=1, keepdims=True), 1e-12)
    attn = jnp.einsum("bnc,bnd->bcd", kn, qn) * p["sigma"].reshape(())
    attn = jax.nn.softmax(attn, axis=-1)
    out = jnp.einsum("bnc,bcd->bnd", v, attn)
    out = out @ p["lin_w"].T
    out = out @ p["conv2_w"].T                                         # conv2 1x1
    return jnp.transpose(out, (0, 2, 1)).reshape(b, c, h, w) + x


if __name__ == "__main__":
    B, DIM, H, W = 2, 8, 16, 16   # N = H*W = 256 -> lane-dense (multiple of 128)

    key = jax.random.PRNGKey(0)
    kx, k1, k2, k3, k4, k5, k6 = jax.random.split(key, 7)

    x = jax.random.normal(kx, (B, DIM, H, W), dtype=jnp.float32)

    params = {
        "ln_weight": 1.0 + 0.1 * jax.random.normal(k5, (DIM,), jnp.float32),
        "ln_bias": 0.1 * jax.random.normal(k6, (DIM,), jnp.float32),
        "conv1_w": 0.1 * jax.random.normal(k1, (DIM, DIM), jnp.float32),
        "qkv_w": 0.1 * jax.random.normal(k2, (3 * DIM, DIM), jnp.float32),
        "lin_w": 0.1 * jax.random.normal(k3, (DIM, DIM), jnp.float32),
        "conv2_w": 0.1 * jax.random.normal(k4, (DIM, DIM), jnp.float32),
        "sigma": jnp.full((1, 1), 1.3, jnp.float32),
    }

    ref = reference(x, params)

    # 1) Exact-semantics check: f32 MXU operands, default batch tiling
    #    (bt=1 -> grid=(2,), megacore-shardable).
    out_f32 = jax.block_until_ready(
        spectral_attention_block(x, params, matmul_dtype=jnp.float32))
    np.testing.assert_allclose(np.asarray(out_f32), np.asarray(ref),
                               rtol=1e-4, atol=1e-4)

    # 2) Performance configuration: bf16 MXU operands, 2 batch elements per
    #    grid step (f32 statistics inside the kernel).
    out_bf16 = jax.block_until_ready(
        spectral_attention_block(x, params, matmul_dtype=jnp.bfloat16,
                                 batch_tile=2))
    np.testing.assert_allclose(np.asarray(out_bf16), np.asarray(ref),
                               rtol=2e-2, atol=2e-2)

    # 3) N-tiled two-pass path (large H*W / v7x VMEM fallback), f32 for a
    #    strict check against the reference.
    out_tiled = jax.block_until_ready(
        spectral_attention_block(x, params, matmul_dtype=jnp.float32,
                                 n_tile=128))
    np.testing.assert_allclose(np.asarray(out_tiled), np.asarray(ref),
                               rtol=1e-4, atol=1e-4)

    print("KERNEL_OK")
</pallas_src>

<mosaic_0001>
module attributes {stable_mosaic.version = 11 : i64} {
  func.func @kernel(%arg0: i32, %arg1: memref<1x8x256xf32, #tpu.memory_space<vmem>>, %arg2: memref<8x1xf32, #tpu.memory_space<vmem>>, %arg3: memref<8x1xf32, #tpu.memory_space<vmem>>, %arg4: memref<24x8xf32, #tpu.memory_space<vmem>>, %arg5: memref<8x8xf32, #tpu.memory_space<vmem>>, %arg6: memref<1x1xf32, #tpu.memory_space<smem>>, %arg7: memref<1x8x256xf32, #tpu.memory_space<vmem>>) attributes {dimension_semantics = [#tpu.dimension_semantics<parallel>], iteration_bounds = array<i64: 2>, scalar_prefetch = 0 : i64, scratch_operands = 0 : i64, tpu.core_type = #tpu.core_type<tc>, window_params = [{transform_indices = @transform_0, window_bounds = array<i64: 1, 8, 256>}, {pipeline_mode = #tpu.pipeline_mode<synchronous>, transform_indices = @transform_1, window_bounds = array<i64: 8, 1>}, {pipeline_mode = #tpu.pipeline_mode<synchronous>, transform_indices = @transform_2, window_bounds = array<i64: 8, 1>}, {pipeline_mode = #tpu.pipeline_mode<synchronous>, transform_indices = @transform_3, window_bounds = array<i64: 24, 8>}, {pipeline_mode = #tpu.pipeline_mode<synchronous>, transform_indices = @transform_4, window_bounds = array<i64: 8, 8>}, {transform_indices = @transform_5, window_bounds = array<i64: 1, 1>}, {transform_indices = @transform_6, window_bounds = array<i64: 1, 8, 256>}]} {
    %c0 = arith.constant 0 : index
    %c0_0 = arith.constant 0 : index
    %0 = vector.load %arg2[%c0, %c0_0] : memref<8x1xf32, #tpu.memory_space<vmem>>, vector<8x1xf32>
    %c0_1 = arith.constant 0 : index
    %c0_2 = arith.constant 0 : index
    %1 = vector.load %arg3[%c0_1, %c0_2] : memref<8x1xf32, #tpu.memory_space<vmem>>, vector<8x1xf32>
    %c0_3 = arith.constant 0 : index
    %c0_4 = arith.constant 0 : index
    %2 = vector.load %arg4[%c0_3, %c0_4] : memref<24x8xf32, #tpu.memory_space<vmem>>, vector<24x8xf32>
    %c0_5 = arith.constant 0 : index
    %c0_6 = arith.constant 0 : index
    %3 = vector.load %arg5[%c0_5, %c0_6] : memref<8x8xf32, #tpu.memory_space<vmem>>, vector<8x8xf32>
    %c0_7 = arith.constant 0 : index
    %c0_8 = arith.constant 0 : index
    %4 = memref.load %arg6[%c0_7, %c0_8] : memref<1x1xf32, #tpu.memory_space<smem>>
    %c0_9 = arith.constant 0 : index
    %c0_10 = arith.constant 0 : index
    %c0_11 = arith.constant 0 : index
    %5 = vector.load %arg1[%c0_9, %c0_10, %c0_11] : memref<1x8x256xf32, #tpu.memory_space<vmem>>, vector<1x8x256xf32>
    %6 = vector.shape_cast %5 : vector<1x8x256xf32> to vector<8x256xf32>
    %cst = arith.constant dense<0.000000e+00> : vector<256xf32>
    %7 = vector.multi_reduction <add>, %6, %cst [0] : vector<8x256xf32> to vector<256xf32>
    %8 = vector.shape_cast %7 : vector<256xf32> to vector<1x256xf32>
    %cst_12 = arith.constant 8.000000e+00 : f32
    %9 = vector.broadcast %cst_12 : f32 to vector<1x256xf32>
    %10 = arith.divf %8, %9 : vector<1x256xf32>
    %11 = vector.broadcast %10 : vector<1x256xf32> to vector<8x256xf32>
    %12 = arith.subf %6, %11 : vector<8x256xf32>
    %13 = arith.mulf %12, %12 : vector<8x256xf32>
    %cst_13 = arith.constant dense<0.000000e+00> : vector<256xf32>
    %14 = vector.multi_reduction <add>, %13, %cst_13 [0] : vector<8x256xf32> to vector<256xf32>
    %15 = vector.shape_cast %14 : vector<256xf32> to vector<1x256xf32>
    %cst_14 = arith.constant 8.000000e+00 : f32
    %16 = vector.broadcast %cst_14 : f32 to vector<1x256xf32>
    %17 = arith.divf %15, %16 : vector<1x256xf32>
    %cst_15 = arith.constant 9.99999974E-6 : f32
    %18 = vector.broadcast %cst_15 : f32 to vector<1x256xf32>
    %19 = arith.addf %17, %18 : vector<1x256xf32>
    %20 = math.rsqrt %19 : vector<1x256xf32>
    %21 = vector.broadcast %20 : vector<1x256xf32> to vector<8x256xf32>
    %22 = arith.mulf %12, %21 : vector<8x256xf32>
    %23 = vector.broadcast %0 : vector<8x1xf32> to vector<8x256xf32>
    %24 = arith.mulf %22, %23 : vector<8x256xf32>
    %25 = vector.broadcast %1 : vector<8x1xf32> to vector<8x256xf32>
    %26 = arith.addf %24, %25 : vector<8x256xf32>
    %cst_16 = arith.constant dense<0.000000e+00> : vector<24x256xf32>
    %27 = tpu.matmul %2, %26, %cst_16 {dimension_numbers = #tpu.dot_dimension_numbers<[1], [0], [0], [1], [0, 0, 1, 1], [], []>} : vector<24x8xf32>, vector<8x256xf32>, vector<24x256xf32> -> vector<24x256xf32>
    %28 = vector.extract_strided_slice %27 {offsets = [0, 0], sizes = [8, 256], strides = [1, 1]} : vector<24x256xf32> to vector<8x256xf32>
    %29 = vector.extract_strided_slice %27 {offsets = [8, 0], sizes = [8, 256], strides = [1, 1]} : vector<24x256xf32> to vector<8x256xf32>
    %30 = vector.extract_strided_slice %27 {offsets = [16, 0], sizes = [8, 256], strides = [1, 1]} : vector<24x256xf32> to vector<8x256xf32>
    %31 = arith.mulf %28, %28 : vector<8x256xf32>
    %cst_17 = arith.constant dense<0.000000e+00> : vector<8xf32>
    %32 = vector.multi_reduction <add>, %31, %cst_17 [1] : vector<8x256xf32> to vector<8xf32>
    %33 = vector.shape_cast %32 : vector<8xf32> to vector<8x1xf32>
    %cst_18 = arith.constant 1.000000e-24 : f32
    %34 = vector.broadcast %cst_18 : f32 to vector<8x1xf32>
    %35 = arith.maximumf %33, %34 : vector<8x1xf32>
    %36 = math.rsqrt %35 : vector<8x1xf32>
    %37 = arith.mulf %29, %29 : vector<8x256xf32>
    %cst_19 = arith.constant dense<0.000000e+00> : vector<8xf32>
    %38 = vector.multi_reduction <add>, %37, %cst_19 [1] : vector<8x256xf32> to vector<8xf32>
    %39 = vector.shape_cast %38 : vector<8xf32> to vector<8x1xf32>
    %cst_20 = arith.constant 1.000000e-24 : f32
    %40 = vector.broadcast %cst_20 : f32 to vector<8x1xf32>
    %41 = arith.maximumf %39, %40 : vector<8x1xf32>
    %42 = math.rsqrt %41 : vector<8x1xf32>
    %cst_21 = arith.constant dense<0.000000e+00> : vector<8x8xf32>
    %43 = tpu.matmul %29, %28, %cst_21 {dimension_numbers = #tpu.dot_dimension_numbers<[1], [1], [0], [0], [0, 0, 1, 0], [], []>} : vector<8x256xf32>, vector<8x256xf32>, vector<8x8xf32> -> vector<8x8xf32>
    %44 = vector.broadcast %4 : f32 to vector<8x1xf32>
    %45 = arith.mulf %44, %42 : vector<8x1xf32>
    %46 = tpu.transpose %36, [1, 0] : vector<8x1xf32> -> vector<1x8xf32>
    %47 = vector.broadcast %45 : vector<8x1xf32> to vector<8x8xf32>
    %48 = vector.broadcast %46 : vector<1x8xf32> to vector<8x8xf32>
    %49 = arith.mulf %47, %48 : vector<8x8xf32>
    %50 = arith.mulf %43, %49 : vector<8x8xf32>
    %51 = math.exp %50 : vector<8x8xf32>
    %cst_22 = arith.constant dense<0.000000e+00> : vector<8xf32>
    %52 = vector.multi_reduction <add>, %51, %cst_22 [1] : vector<8x8xf32> to vector<8xf32>
    %53 = vector.shape_cast %52 : vector<8xf32> to vector<8x1xf32>
    %54 = vector.broadcast %53 : vector<8x1xf32> to vector<8x8xf32>
    %55 = arith.divf %51, %54 : vector<8x8xf32>
    %cst_23 = arith.constant dense<0.000000e+00> : vector<8x256xf32>
    %56 = tpu.matmul %55, %30, %cst_23 {dimension_numbers = #tpu.dot_dimension_numbers<[0], [0], [1], [1], [0, 1, 1, 1], [], []>} : vector<8x8xf32>, vector<8x256xf32>, vector<8x256xf32> -> vector<8x256xf32>
    %cst_24 = arith.constant dense<0.000000e+00> : vector<8x256xf32>
    %57 = tpu.matmul %3, %56, %cst_24 {dimension_numbers = #tpu.dot_dimension_numbers<[1], [0], [0], [1], [0, 0, 1, 1], [], []>} : vector<8x8xf32>, vector<8x256xf32>, vector<8x256xf32> -> vector<8x256xf32>
    %58 = arith.addf %57, %6 : vector<8x256xf32>
    %c0_25 = arith.constant 0 : index
    %c0_26 = arith.constant 0 : index
    %c0_27 = arith.constant 0 : index
    %59 = vector.load %arg7[%c0_25, %c0_26, %c0_27] : memref<1x8x256xf32, #tpu.memory_space<vmem>>, vector<1x8x256xf32>
    %60 = vector.shape_cast %59 : vector<1x8x256xf32> to vector<8x256xf32>
    %61 = vector.shape_cast %58 : vector<8x256xf32> to vector<1x8x256xf32>
    tpu.vector_store %arg7[%c0_25, %c0_26, %c0_27], %61 {strides = array<i32>} : memref<1x8x256xf32, #tpu.memory_space<vmem>>, vector<1x8x256xf32>,
    return
  }
  func.func @transform_0(%arg0: i32) -> (i32, i32, i32) {
    %c0_i32 = arith.constant 0 : i32
    %c0_i32_0 = arith.constant 0 : i32
    %c0_i32_1 = arith.constant 0 : i32
    return %arg0, %c0_i32, %c0_i32_0 : i32, i32, i32
  }
  func.func @transform_1(%arg0: i32) -> (i32, i32) {
    %c0_i32 = arith.constant 0 : i32
    %c0_i32_0 = arith.constant 0 : i32
    %c0_i32_1 = arith.constant 0 : i32
    return %c0_i32, %c0_i32_0 : i32, i32
  }
  func.func @transform_2(%arg0: i32) -> (i32, i32) {
    %c0_i32 = arith.constant 0 : i32
    %c0_i32_0 = arith.constant 0 : i32
    %c0_i32_1 = arith.constant 0 : i32
    return %c0_i32, %c0_i32_0 : i32, i32
  }
  func.func @transform_3(%arg0: i32) -> (i32, i32) {
    %c0_i32 = arith.constant 0 : i32
    %c0_i32_0 = arith.constant 0 : i32
    %c0_i32_1 = arith.constant 0 : i32
    return %c0_i32, %c0_i32_0 : i32, i32
  }
  func.func @transform_4(%arg0: i32) -> (i32, i32) {
    %c0_i32 = arith.constant 0 : i32
    %c0_i32_0 = arith.constant 0 : i32
    %c0_i32_1 = arith.constant 0 : i32
    return %c0_i32, %c0_i32_0 : i32, i32
  }
  func.func @transform_5(%arg0: i32) -> (i32, i32) {
    %c0_i32 = arith.constant 0 : i32
    %c0_i32_0 = arith.constant 0 : i32
    %c0_i32_1 = arith.constant 0 : i32
    return %c0_i32, %c0_i32_0 : i32, i32
  }
  func.func @transform_6(%arg0: i32) -> (i32, i32, i32) {
    %c0_i32 = arith.constant 0 : i32
    %c0_i32_0 = arith.constant 0 : i32
    %c0_i32_1 = arith.constant 0 : i32
    return %arg0, %c0_i32, %c0_i32_0 : i32, i32, i32
  }
}

</mosaic_0001>

<llo_original>
// kernel: tpu_custom_call.1
$region0: #{tpu_custom_call.1}
  #allocation0 [shape = 'u32[]', space=smem, size = 0x4, offset = 0x4, fixed_abs, tag = 'smem constant byte address 0x4 - core index']
  #allocation1 [shape = 'u32[144,128]{1,0:T(1,128)}', space=vmem, size = 0x12000, scoped, tag = 'internal scratch']
  #allocation2 [shape = 'f32[1,1]{1,0:T(1,128)S(6)}', space=smem, size = 0x200, scoped, tag = 'scoped memory for tpu_custom_call.1']
  %s0 = inlined_call_operand.vmem [shape: f32[2,8,256], index: 0, kind: input, shape index: {}]
  %s1 = inlined_call_operand.vmem [shape: f32[8,1], index: 1, kind: input, shape index: {}]
  %s2 = inlined_call_operand.vmem [shape: f32[8,1], index: 2, kind: input, shape index: {}]
  %s3 = inlined_call_operand.vmem [shape: f32[24,8], index: 3, kind: input, shape index: {}]
  %s4 = inlined_call_operand.vmem [shape: f32[8,8], index: 4, kind: input, shape index: {}]
  %s5 = inlined_call_operand.<no memory space> [shape: f32[1,1], index: 5, kind: input, shape index: {}]
  %s6 = inlined_call_operand.hbm [shape: f32[2,8,256], index: 6, kind: output, shape index: {}]
  %s7 = sld [smem:[#allocation0]]
  $region57: #{tpu_custom_call.1} parent=0
    _
  %s9 = ssub.s32 1, %s7
  %s10 = scalar_select 0, %s9, %s7
  %11 = sst [smem:[#allocation2]] %s5
  $region1: #{tpu_custom_call.1} parent=0
    #allocation3 [shape = 'u8[16384]{0}', space=vmem, size = 0x4000, scoped, tag = 'output window, operand 0']
    #allocation4 [shape = 's32[2]{0}', space=sflag, size = 0x8, scoped, tag = 'scoped memory for tpu_custom_call.1']
    %12 = vsyncpa [#allocation4], 0
    %s13 = scalar_lea.sflag [#allocation4], 1
    %14 = vsyncpa %s13, 0
    loop: start=0, step=1, limit=4
    $region2: #{tpu_custom_call.1} parent=1 // loop_pre_header
      _
    $region3: #{tpu_custom_call.1} parent=1 // loop_header
      %s16 = sphi 0, %s20
      %p17 = scmp.ge.s32.totalorder %s16, 4
      %s26 = sphi 0, %s28
      %s29 = sphi 0, %s26
      %s30 = sphi 0, %s29
      %s46 = sphi 0, %s30
      %s50 = sphi 0, %s50
      %s52 = sphi 0, %s50
      %s53 = sphi 0, %s52
      %s67 = sphi 0, %s53
      %s71 = sphi 0, %s71
      %s73 = sphi 0, %s71
      %s74 = sphi 0, %s73
      %s88 = sphi 0, %s74
      %s92 = sphi 0, %s92
      %s94 = sphi 0, %s92
      %s95 = sphi 0, %s94
      %s109 = sphi 0, %s95
      %s113 = sphi 0, %s113
      %s115 = sphi 0, %s113
      %s116 = sphi 0, %s115
      %s130 = sphi 0, %s116
      %s134 = sphi 0, %s134
      %s136 = sphi 0, %s134
      %s137 = sphi 0, %s136
      %s151 = sphi 0, %s137
      %s157 = sphi 0, %s159
      %s160 = sphi 0, %s157
      %s161 = sphi 0, %s160
      %s177 = sphi 0, %s161
    $region4: #{tpu_custom_call.1} parent=1 // loop_header_branch
      %19 = sbr.rel (%p17) target = $region8
    $region5: #{tpu_custom_call.1} parent=1 // loop_body
      %s21 = ssub.s32 %s16, 1
      %s22 = ssub.s32 %s16, 2
      %s23 = sadd.s32 %s16, 1
      %s24 = ssub.s32 %s16, %s23
      %p25 = scmp.eq.s32.totalorder %s24, 0
      %s27 = sadd.s32 %s26, 1
      %s28 = scalar_select %p25, %s26, %s27
      %p31 = pneg %p25
      %p32 = scmp.eq.s32.totalorder %s16, 1
      %p33 = por %p31, %p32
      %p34 = scmp.ne.s32.totalorder %s26, %s29
      %p35 = scmp.eq.s32.totalorder %s16, 0
      %p36 = por %p34, %p35
      %p37 = scmp.ne.s32.totalorder %s26, %s29
      %p38 = scmp.eq.s32.totalorder %s21, 1
      %p39 = por %p37, %p38
      %p40 = scmp.ne.s32.totalorder %s29, %s30
      %p41 = scmp.eq.s32.totalorder %s21, 0
      %p42 = por %p40, %p41
      %p43 = scmp.ne.s32.totalorder %s29, %s30
      %p44 = scmp.eq.s32.totalorder %s22, 1
      %p45 = por %p43, %p44
      %p47 = scmp.ne.s32.totalorder %s30, %s46
      %p48 = scmp.eq.s32.totalorder %s22, 0
      %p49 = por %p47, %p48
      %s51 = sadd.s32 %s50, 1
      %p54 = scmp.eq.s32.totalorder %s16, 1
      %p55 = scmp.ne.s32.totalorder %s50, %s52
      %p56 = scmp.eq.s32.totalorder %s16, 0
      %p57 = por %p55, %p56
      %p58 = scmp.ne.s32.totalorder %s50, %s52
      %p59 = scmp.eq.s32.totalorder %s21, 1
      %p60 = por %p58, %p59
      %p61 = scmp.ne.s32.totalorder %s52, %s53
      %p62 = scmp.eq.s32.totalorder %s21, 0
      %p63 = por %p61, %p62
      %p64 = scmp.ne.s32.totalorder %s52, %s53
      %p65 = scmp.eq.s32.totalorder %s22, 1
      %p66 = por %p64, %p65
      %p68 = scmp.ne.s32.totalorder %s53, %s67
      %p69 = scmp.eq.s32.totalorder %s22, 0
      %p70 = por %p68, %p69
      %s72 = sadd.s32 %s71, 1
      %p75 = scmp.eq.s32.totalorder %s16, 1
      %p76 = scmp.ne.s32.totalorder %s71, %s73
      %p77 = scmp.eq.s32.totalorder %s16, 0
      %p78 = por %p76, %p77
      %p79 = scmp.ne.s32.totalorder %s71, %s73
      %p80 = scmp.eq.s32.totalorder %s21, 1
      %p81 = por %p79, %p80
      %p82 = scmp.ne.s32.totalorder %s73, %s74
      %p83 = scmp.eq.s32.totalorder %s21, 0
      %p84 = por %p82, %p83
      %p85 = scmp.ne.s32.totalorder %s73, %s74
      %p86 = scmp.eq.s32.totalorder %s22, 1
      %p87 = por %p85, %p86
      %p89 = scmp.ne.s32.totalorder %s74, %s88
      %p90 = scmp.eq.s32.totalorder %s22, 0
      %p91 = por %p89, %p90
      %s93 = sadd.s32 %s92, 1
      %p96 = scmp.eq.s32.totalorder %s16, 1
      %p97 = scmp.ne.s32.totalorder %s92, %s94
      %p98 = scmp.eq.s32.totalorder %s16, 0
      %p99 = por %p97, %p98
      %p100 = scmp.ne.s32.totalorder %s92, %s94
      %p101 = scmp.eq.s32.totalorder %s21, 1
      %p102 = por %p100, %p101
      %p103 = scmp.ne.s32.totalorder %s94, %s95
      %p104 = scmp.eq.s32.totalorder %s21, 0
      %p105 = por %p103, %p104
      %p106 = scmp.ne.s32.totalorder %s94, %s95
      %p107 = scmp.eq.s32.totalorder %s22, 1
      %p108 = por %p106, %p107
      %p110 = scmp.ne.s32.totalorder %s95, %s109
      %p111 = scmp.eq.s32.totalorder %s22, 0
      %p112 = por %p110, %p111
      %s114 = sadd.s32 %s113, 1
      %p117 = scmp.eq.s32.totalorder %s16, 1
      %p118 = scmp.ne.s32.totalorder %s113, %s115
      %p119 = scmp.eq.s32.totalorder %s16, 0
      %p120 = por %p118, %p119
      %p121 = scmp.ne.s32.totalorder %s113, %s115
      %p122 = scmp.eq.s32.totalorder %s21, 1
      %p123 = por %p121, %p122
      %p124 = scmp.ne.s32.totalorder %s115, %s116
      %p125 = scmp.eq.s32.totalorder %s21, 0
      %p126 = por %p124, %p125
      %p127 = scmp.ne.s32.totalorder %s115, %s116
      %p128 = scmp.eq.s32.totalorder %s22, 1
      %p129 = por %p127, %p128
      %p131 = scmp.ne.s32.totalorder %s116, %s130
      %p132 = scmp.eq.s32.totalorder %s22, 0
      %p133 = por %p131, %p132
      %s135 = sadd.s32 %s134, 1
      %p138 = scmp.eq.s32.totalorder %s16, 1
      %p139 = scmp.ne.s32.totalorder %s134, %s136
      %p140 = scmp.eq.s32.totalorder %s16, 0
      %p141 = por %p139, %p140
      %p142 = scmp.ne.s32.totalorder %s134, %s136
      %p143 = scmp.eq.s32.totalorder %s21, 1
      %p144 = por %p142, %p143
      %p145 = scmp.ne.s32.totalorder %s136, %s137
      %p146 = scmp.eq.s32.totalorder %s21, 0
      %p147 = por %p145, %p146
      %p148 = scmp.ne.s32.totalorder %s136, %s137
      %p149 = scmp.eq.s32.totalorder %s22, 1
      %p150 = por %p148, %p149
      %p152 = scmp.ne.s32.totalorder %s137, %s151
      %p153 = scmp.eq.s32.totalorder %s22, 0
      %p154 = por %p152, %p153
      %s155 = ssub.s32 %s16, %s23
      %p156 = scmp.eq.s32.totalorder %s155, 0
      %s158 = sadd.s32 %s157, 1
      %s159 = scalar_select %p156, %s157, %s158
      %p162 = pneg %p156
      %p163 = scmp.eq.s32.totalorder %s16, 1
      %p164 = por %p162, %p163
      %p165 = scmp.ne.s32.totalorder %s157, %s160
      %p166 = scmp.eq.s32.totalorder %s16, 0
      %p167 = por %p165, %p166
      %p168 = scmp.ne.s32.totalorder %s157, %s160
      %p169 = scmp.eq.s32.totalorder %s21, 1
      %p170 = por %p168, %p169
      %p171 = scmp.ne.s32.totalorder %s160, %s161
      %p172 = scmp.eq.s32.totalorder %s21, 0
      %p173 = por %p171, %p172
      %p174 = scmp.ne.s32.totalorder %s160, %s161
      %p175 = scmp.eq.s32.totalorder %s22, 1
      %p176 = por %p174, %p175
      %p178 = scmp.ne.s32.totalorder %s161, %s177
      %p179 = scmp.eq.s32.totalorder %s22, 0
      %p180 = por %p178, %p179
      %p181 = scmp.le.s32.totalorder 1, %s16
      %p182 = scmp.lt.s32.totalorder %s16, 3
      %p183 = pnand %p181, %p182
      %p184 = pneg %p183
      // Predicated region
      $region9: #{tpu_custom_call.1} parent=5 // pred_check
        _
      $region10: #{tpu_custom_call.1} parent=5 // pred_check_branch
        %186 = sbr.rel (%p183) target = $region12
      $region11: #{tpu_custom_call.1} parent=5 // pred_region
        %s187 = ssub.s32 %s16, 1
        // Predicated region
        $region13: #{tpu_custom_call.1} parent=11 // pred_check
          %p188 = pneg %p63
        $region14: #{tpu_custom_call.1} parent=11 // pred_check_branch
          %190 = sbr.rel (%p188) target = $region16
        $region15: #{tpu_custom_call.1} parent=11 // pred_region
          _
        $region16: #{tpu_custom_call.1} parent=11 // pred_fallthru
          _
        // Predicated region
        $region17: #{tpu_custom_call.1} parent=11 // pred_check
          %p191 = pneg %p84
        $region18: #{tpu_custom_call.1} parent=11 // pred_check_branch
          %193 = sbr.rel (%p191) target = $region20
        $region19: #{tpu_custom_call.1} parent=11 // pred_region
          _
        $region20: #{tpu_custom_call.1} parent=11 // pred_fallthru
          _
        // Predicated region
        $region21: #{tpu_custom_call.1} parent=11 // pred_check
          %p194 = pneg %p105
        $region22: #{tpu_custom_call.1} parent=11 // pred_check_branch
          %196 = sbr.rel (%p194) target = $region24
        $region23: #{tpu_custom_call.1} parent=11 // pred_region
          _
        $region24: #{tpu_custom_call.1} parent=11 // pred_fallthru
          _
        // Predicated region
        $region25: #{tpu_custom_call.1} parent=11 // pred_check
          %p197 = pneg %p126
        $region26: #{tpu_custom_call.1} parent=11 // pred_check_branch
          %199 = sbr.rel (%p197) target = $region28
        $region27: #{tpu_custom_call.1} parent=11 // pred_region
          _
        $region28: #{tpu_custom_call.1} parent=11 // pred_fallthru
          _
        // Predicated region
        $region29: #{tpu_custom_call.1} parent=11 // pred_check
          %p200 = pneg %p147
        $region30: #{tpu_custom_call.1} parent=11 // pred_check_branch
          %202 = sbr.rel (%p200) target = $region32
        $region31: #{tpu_custom_call.1} parent=11 // pred_region
          _
        $region32: #{tpu_custom_call.1} parent=11 // pred_fallthru
          _
      $region12: #{tpu_custom_call.1} parent=5 // pred_fallthru
        _
      %p203 = scmp.lt.s32.totalorder %s16, 2
      // Predicated region
      $region33: #{tpu_custom_call.1} parent=5 // pred_check
        %p204 = pneg %p203
      $region34: #{tpu_custom_call.1} parent=5 // pred_check_branch
        %206 = sbr.rel (%p204) target = $region36
      $region35: #{tpu_custom_call.1} parent=5 // pred_region
        // Predicated region
        $region37: #{tpu_custom_call.1} parent=35 // pred_check
          %p207 = pneg %p36
        $region38: #{tpu_custom_call.1} parent=35 // pred_check_branch
          %209 = sbr.rel (%p207) target = $region40
        $region39: #{tpu_custom_call.1} parent=35 // pred_region
          %p210 = scmp.lt.s32.totalorder %s16, 1
          %s211 = scalar_select %p210, %s16, 1
          %s212 = smul.addr %s211, 2
          %s213 = smul.addr %s212, 8
          %s214 = scalar_lea.vmem %s0, %s213
        $region40: #{tpu_custom_call.1} parent=35 // pred_fallthru
          _
      $region36: #{tpu_custom_call.1} parent=5 // pred_fallthru
        _
      %p215 = scmp.le.s32.totalorder 1, %s16
      %p216 = scmp.lt.s32.totalorder %s16, 3
      %p217 = pnand %p215, %p216
      %p218 = pneg %p217
      // Predicated region
      $region41: #{tpu_custom_call.1} parent=5 // pred_check
        _
      $region42: #{tpu_custom_call.1} parent=5 // pred_check_branch
        %220 = sbr.rel (%p217) target = $region44
      $region43: #{tpu_custom_call.1} parent=5 // pred_region
        %s221 = ssub.s32 %s16, 1
        %p222 = scmp.lt.s32.totalorder %s21, 1
        %s223 = scalar_select %p222, %s21, 1
        %s224 = smul.addr %s223, 2
        %s225 = smul.addr %s224, 8
        %s226 = scalar_lea.vmem %s0, %s225
        %p227 = pneg %p42
        %p228 = pneg %p39
        %p229 = pneg %p63
        %p230 = pneg %p60
        %p231 = pneg %p84
        %p232 = pneg %p81
        %p233 = pneg %p105
        %p234 = pneg %p102
        %p235 = pneg %p126
        %p236 = pneg %p123
        %p237 = pneg %p147
        %p238 = pneg %p144
        %p239 = pneg %p173
        %p240 = pneg %p170
        %s241 = sand.u32 %s160, 1
        %s242 = scalar_lea.sflag [#allocation4], %s241
        %s243 = sand.u32 %s160, 1
        %s244 = smul.addr %s243, 16
        %s245 = scalar_lea.vmem [#allocation3], %s244
        %p246 = scmp.lt.s32.totalorder %s21, 1
        %s247 = scalar_select %p246, %s21, 1
        %s248 = smul.addr %s247, 2
        %s249 = smul.addr %s248, 8
        %s250 = scalar_lea.vmem %s0, %s249
        %v251 = vld [vmem:[%s1] sm:$0xff]
        %v252 = vld [vmem:[%s2] sm:$0xff]
        %v253 = vld [vmem:[%s3] sm:$0xff]
        %v254 = vld [vmem:[%s3 + $0x8] sm:$0xff]
        %v255 = vld [vmem:[%s3 + $0x10] sm:$0xff]
        %v256 = vld [vmem:[%s4] sm:$0xff]
        %s257 = sld [smem:[#allocation2]]
        %v258 = vld [vmem:[%s250] sm:$0xff]
        %v259 = vld [vmem:[%s250 + $0x8] sm:$0xff]
        %v260 = vrot.slane %v258, 4
        %v261 = vadd.f32 %v258, %v260
        %v262 = vrot.slane %v261, 2
        %v263 = vadd.f32 %v261, %v262
        %v264 = vrot.slane %v263, 1
        %v265 = vadd.f32 %v263, %v264
        %v266 = vrot.slane %v259, 4
        %v267 = vadd.f32 %v259, %v266
        %v268 = vrot.slane %v267, 2
        %v269 = vadd.f32 %v267, %v268
        %v270 = vrot.slane %v269, 1
        %v271 = vadd.f32 %v269, %v270
        %v272 = vrcp.pop 8.0
        %v273 = vmul.f32 %v265, %v272
        %v274 = vmul.f32 %v271, %v272
        %v275 = vsub.f32 %v258, %v273
        %v276 = vsub.f32 %v259, %v274
        %v277 = vmul.f32 %v275, %v275
        %v278 = vmul.f32 %v276, %v276
        %v279 = vrot.slane %v277, 4
        %v280 = vadd.f32 %v277, %v279
        %v281 = vrot.slane %v280, 2
        %v282 = vadd.f32 %v280, %v281
        %v283 = vrot.slane %v282, 1
        %v284 = vadd.f32 %v282, %v283
        %v285 = vrot.slane %v278, 4
        %v286 = vadd.f32 %v278, %v285
        %v287 = vrot.slane %v286, 2
        %v288 = vadd.f32 %v286, %v287
        %v289 = vrot.slane %v288, 1
        %v290 = vadd.f32 %v288, %v289
        %v291 = vmul.f32 %v284, %v272
        %v292 = vmul.f32 %v290, %v272
        %v293 = vadd.f32 %v291, 1e-05
        %v294 = vadd.f32 %v292, 1e-05
        %v295 = vrsqrt.pop %v293
        %v296 = vrsqrt.pop %v294
        %v297 = vmul.f32 %v275, %v295
        %v298 = vmul.f32 %v276, %v296
        %300 = vset.pattern.permute.xlu0 0
        %301 = vperm.xlu0 %300, %v251
        %v302 = vpop.permute.xlu0 %301
        %v304 = vmul.f32 %v297, %v302
        %v305 = vmul.f32 %v298, %v302
        %307 = vset.pattern.permute.xlu0 0
        %308 = vperm.xlu0 %307, %v252
        %v309 = vpop.permute.xlu0 %308
        %v311 = vadd.f32 %v304, %v309
        %v312 = vadd.f32 %v305, %v309
        %vm313 = vcmask 64512
        %v315 = vsel %vm313, %v253, 0
        %v318 = vsel %vm313, %v254, 0
        %v321 = vsel %vm313, %v255, 0
        %323 = vmatprep.subr.mxu0 %v312
        %324 = vmatpush1.msra.mxu0 %v311
        %325 = vmatprep.subr.mxu0 0.0
        %326 = vmatpush1.msra.mxu0 0.0
        %327 = vmatprep.subr.mxu0 0.0
        %328 = vmatpush1.msra.mxu0 0.0
        %329 = vmatprep.subr.mxu0 0.0
        %330 = vmatpush1.msra.mxu0 0.0
        %331 = vmatprep.subr.mxu0 0.0
        %332 = vmatpush1.msra.mxu0 0.0
        %333 = vmatprep.subr.mxu0 0.0
        %334 = vmatpush1.msra.mxu0 0.0
        %335 = vmatprep.subr.mxu0 0.0
        %336 = vmatpush1.msra.mxu0 0.0
        %337 = vmatprep.subr.mxu0 0.0
        %338 = vmatpush1.msra.mxu0 0.0
        %339 = vmatprep.subr.mxu0 0.0
        %340 = vmatpush1.msra.mxu0 0.0
        %341 = vmatprep.subr.mxu0 0.0
        %342 = vmatpush1.msra.mxu0 0.0
        %343 = vmatprep.subr.mxu0 0.0
        %344 = vmatpush1.msra.mxu0 0.0
        %345 = vmatprep.subr.mxu0 0.0
        %346 = vmatpush1.msra.mxu0 0.0
        %347 = vmatprep.subr.mxu0 0.0
        %348 = vmatpush1.msra.mxu0 0.0
        %349 = vmatprep.subr.mxu0 0.0
        %350 = vmatpush1.msra.mxu0 0.0
        %351 = vmatprep.subr.mxu0 0.0
        %352 = vmatpush1.msra.mxu0 0.0
        %353 = vmatprep.subr.mxu0 0.0
        %354 = vmatpush1.msra.mxu0 0.0
        %355 = vmatprep.subr.mxu0 0.0
        %356 = vmatpush1.msra.mxu0 0.0
        %357 = vmatprep.subr.mxu0 0.0
        %358 = vmatpush1.msra.mxu0 0.0
        %359 = vmatprep.subr.mxu0 0.0
        %360 = vmatpush1.msra.mxu0 0.0
        %361 = vmatprep.subr.mxu0 0.0
        %362 = vmatpush1.msra.mxu0 0.0
        %363 = vmatprep.subr.mxu0 0.0
        %364 = vmatpush1.msra.mxu0 0.0
        %365 = vmatprep.subr.mxu0 0.0
        %366 = vmatpush1.msra.mxu0 0.0
        %367 = vmatprep.subr.mxu0 0.0
        %368 = vmatpush1.msra.mxu0 0.0
        %369 = vmatprep.subr.mxu0 0.0
        %370 = vmatpush1.msra.mxu0 0.0
        %371 = vmatprep.subr.mxu0 0.0
        %372 = vmatpush1.msra.mxu0 0.0
        %373 = vmatprep.subr.mxu0 0.0
        %374 = vmatpush1.msra.mxu0 0.0
        %375 = vmatprep.subr.mxu0 0.0
        %376 = vmatpush1.msra.mxu0 0.0
        %377 = vmatprep.subr.mxu0 0.0
        %378 = vmatpush1.msra.mxu0 0.0
        %379 = vmatprep.subr.mxu0 0.0
        %380 = vmatpush1.msra.mxu0 0.0
        %381 = vmatprep.subr.mxu0 0.0
        %382 = vmatpush1.msra.mxu0 0.0
        %383 = vmatprep.subr.mxu0 0.0
        %384 = vmatpush1.msra.mxu0 0.0
        %385 = vmatprep.subr.mxu0 0.0
        %386 = vmatpush1.msra.mxu0 0.0
        %387 = vmatprep.mubr.f32.mxu0 0.0
        %388 = vmatmul.mubr.f32.gmra.mrb[0].mxu0 %v315
        %v389 = vpop.f32.mrb[0].mxu0
        %v390 = vadd.f32 0.0, %v389
        %v391 = vpop.f32.mrb[0].mxu0
        %v392 = vadd.f32 0.0, %v391
        %393 = vmatprep.mubr.f32.mxu0 0.0
        %394 = vmatmul.mubr.f32.gmra.mrb[0].mxu0 %v318
        %v395 = vpop.f32.mrb[0].mxu0
        %v396 = vadd.f32 0.0, %v395
        %v397 = vpop.f32.mrb[0].mxu0
        %v398 = vadd.f32 0.0, %v397
        %399 = vmatprep.mubr.f32.mxu0 0.0
        %400 = vmatmul.mubr.f32.gmra.mrb[0].mxu0 %v321
        %v401 = vpop.f32.mrb[0].mxu0
        %v402 = vadd.f32 0.0, %v401
        %v403 = vpop.f32.mrb[0].mxu0
        %v404 = vadd.f32 0.0, %v403
        %405 = vdwg.mxu0
        %v406 = vmul.f32 %v390, %v390
        %v407 = vmul.f32 %v392, %v392
        %v408 = vadd.f32 %v406, %v407
        %409 = vadd.xlane.f32.xlu0 %v408
        %v410 = vpop.xlane.xlu0 %409
        %v411 = vmax.f32 %v410, 1e-24
        %v412 = vrsqrt.pop %v411
        %v413 = vmul.f32 %v396, %v396
        %v414 = vmul.f32 %v398, %v398
        %v415 = vadd.f32 %v413, %v414
        %416 = vadd.xlane.f32.xlu0 %v415
        %v417 = vpop.xlane.xlu0 %416
        %v418 = vmax.f32 %v417, 1e-24
        %v419 = vrsqrt.pop %v418
        %420 = vmatprep.subr.mxu0 %v392
        %421 = vmatpush1.xpose.msra.mxu0 %v390
        %422 = vmatprep.subr.mxu0 0.0
        %423 = vmatpush1.xpose.msra.mxu0 0.0
        %424 = vmatprep.subr.mxu0 0.0
        %425 = vmatpush1.xpose.msra.mxu0 0.0
        %426 = vmatprep.subr.mxu0 0.0
        %427 = vmatpush1.xpose.msra.mxu0 0.0
        %428 = vmatprep.subr.mxu0 0.0
        %429 = vmatpush1.xpose.msra.mxu0 0.0
        %430 = vmatprep.subr.mxu0 0.0
        %431 = vmatpush1.xpose.msra.mxu0 0.0
        %432 = vmatprep.subr.mxu0 0.0
        %433 = vmatpush1.xpose.msra.mxu0 0.0
        %434 = vmatprep.subr.mxu0 0.0
        %435 = vmatpush1.xpose.msra.mxu0 0.0
        %436 = vmatprep.subr.mxu0 0.0
        %437 = vmatpush1.xpose.msra.mxu0 0.0
        %438 = vmatprep.subr.mxu0 0.0
        %439 = vmatpush1.xpose.msra.mxu0 0.0
        %440 = vmatprep.subr.mxu0 0.0
        %441 = vmatpush1.xpose.msra.mxu0 0.0
        %442 = vmatprep.subr.mxu0 0.0
        %443 = vmatpush1.xpose.msra.mxu0 0.0
        %444 = vmatprep.subr.mxu0 0.0
        %445 = vmatpush1.xpose.msra.mxu0 0.0
        %446 = vmatprep.subr.mxu0 0.0
        %447 = vmatpush1.xpose.msra.mxu0 0.0
        %448 = vmatprep.subr.mxu0 0.0
        %449 = vmatpush1.xpose.msra.mxu0 0.0
        %450 = vmatprep.subr.mxu0 0.0
        %451 = vmatpush1.xpose.msra.mxu0 0.0
        %452 = vmatprep.subr.mxu0 0.0
        %453 = vmatpush1.xpose.msra.mxu0 0.0
        %454 = vmatprep.subr.mxu0 0.0
        %455 = vmatpush1.xpose.msra.mxu0 0.0
        %456 = vmatprep.subr.mxu0 0.0
        %457 = vmatpush1.xpose.msra.mxu0 0.0
        %458 = vmatprep.subr.mxu0 0.0
        %459 = vmatpush1.xpose.msra.mxu0 0.0
        %460 = vmatprep.subr.mxu0 0.0
        %461 = vmatpush1.xpose.msra.mxu0 0.0
        %462 = vmatprep.subr.mxu0 0.0
        %463 = vmatpush1.xpose.msra.mxu0 0.0
        %464 = vmatprep.subr.mxu0 0.0
        %465 = vmatpush1.xpose.msra.mxu0 0.0
        %466 = vmatprep.subr.mxu0 0.0
        %467 = vmatpush1.xpose.msra.mxu0 0.0
        %468 = vmatprep.subr.mxu0 0.0
        %469 = vmatpush1.xpose.msra.mxu0 0.0
        %470 = vmatprep.subr.mxu0 0.0
        %471 = vmatpush1.xpose.msra.mxu0 0.0
        %472 = vmatprep.subr.mxu0 0.0
        %473 = vmatpush1.xpose.msra.mxu0 0.0
        %474 = vmatprep.subr.mxu0 0.0
        %475 = vmatpush1.xpose.msra.mxu0 0.0
        %476 = vmatprep.subr.mxu0 0.0
        %477 = vmatpush1.xpose.msra.mxu0 0.0
        %478 = vmatprep.subr.mxu0 0.0
        %479 = vmatpush1.xpose.msra.mxu0 0.0
        %480 = vmatprep.subr.mxu0 0.0
        %481 = vmatpush1.xpose.msra.mxu0 0.0
        %482 = vmatprep.subr.mxu0 0.0
        %483 = vmatpush1.xpose.msra.mxu0 0.0
        %484 = vmatprep.mubr.f32.mxu0 %v398
        %485 = vmatmul.mubr.f32.gmra.mrb[0].mxu0 %v396
        %v486 = vpop.f32.mrb[0].mxu0
        %v487 = vadd.f32 0.0, %v486
        %v488 = vpop.f32.mrb[0].mxu0
        %489 = vdwg.mxu0
        %v490 = vstv %s257
        %v491 = vmul.f32 %v490, %v419
        %492 = vxpose.xlu0.b32.start [1/16] %v412, 128
        %493 = vxpose.xlu0.b32.cont [2/16] 0.0, 128
        %494 = vxpose.xlu0.b32.cont [3/16] 0.0, 128
        %495 = vxpose.xlu0.b32.cont [4/16] 0.0, 128
        %496 = vxpose.xlu0.b32.cont [5/16] 0.0, 128
        %497 = vxpose.xlu0.b32.cont [6/16] 0.0, 128
        %498 = vxpose.xlu0.b32.cont [7/16] 0.0, 128
        %499 = vxpose.xlu0.b32.cont [8/16] 0.0, 128
        %500 = vxpose.xlu0.b32.cont [9/16] 0.0, 128
        %501 = vxpose.xlu0.b32.cont [10/16] 0.0, 128
        %502 = vxpose.xlu0.b32.cont [11/16] 0.0, 128
        %503 = vxpose.xlu0.b32.cont [12/16] 0.0, 128
        %504 = vxpose.xlu0.b32.cont [13/16] 0.0, 128
        %505 = vxpose.xlu0.b32.cont [14/16] 0.0, 128
        %506 = vxpose.xlu0.b32.cont [15/16] 0.0, 128
        %507 = vxpose.xlu0.b32.end [16/16] 0.0, 128
        %v508 = vpop.trf.xlu0
        %v509 = vpop.trf.xlu0
        %v510 = vpop.trf.xlu0
        %v511 = vpop.trf.xlu0
        %v512 = vpop.trf.xlu0
        %v513 = vpop.trf.xlu0
        %v514 = vpop.trf.xlu0
        %v515 = vpop.trf.xlu0
        %v516 = vpop.trf.xlu0
        %v517 = vpop.trf.xlu0
        %v518 = vpop.trf.xlu0
        %v519 = vpop.trf.xlu0
        %v520 = vpop.trf.xlu0
        %v521 = vpop.trf.xlu0
        %v522 = vpop.trf.xlu0
        %v523 = vpop.trf.xlu0
        %v524 = vlaneseq
        %v525 = vshrl.u32 %v524, 7
        %v526 = vsub.s32 0, %v525
        %v527 = vrot.slane %v508, %v526
        %v528 = vmul.f32 %v491, %v527
        %v529 = vmul.f32 %v487, %v528
        %v530 = vmul.f32 %v529, 1.442695
        %v531 = vpow.pop %v530
        %v532 = vsel %vm313, %v531, 0.0
        %533 = vadd.xlane.f32.xlu0 %v532
        %v534 = vpop.xlane.xlu0 %533
        %v535 = vrcp.pop %v534
        %v536 = vmul.f32 %v531, %v535
        %537 = vxpose.xlu0.b32.start [1/16] %v536, 128
        %538 = vxpose.xlu0.b32.cont [2/16] 0.0, 128
        %539 = vxpose.xlu0.b32.cont [3/16] 0.0, 128
        %540 = vxpose.xlu0.b32.cont [4/16] 0.0, 128
        %541 = vxpose.xlu0.b32.cont [5/16] 0.0, 128
        %542 = vxpose.xlu0.b32.cont [6/16] 0.0, 128
        %543 = vxpose.xlu0.b32.cont [7/16] 0.0, 128
        %544 = vxpose.xlu0.b32.cont [8/16] 0.0, 128
        %545 = vxpose.xlu0.b32.cont [9/16] 0.0, 128
        %546 = vxpose.xlu0.b32.cont [10/16] 0.0, 128
        %547 = vxpose.xlu0.b32.cont [11/16] 0.0, 128
        %548 = vxpose.xlu0.b32.cont [12/16] 0.0, 128
        %549 = vxpose.xlu0.b32.cont [13/16] 0.0, 128
        %550 = vxpose.xlu0.b32.cont [14/16] 0.0, 128
        %551 = vxpose.xlu0.b32.cont [15/16] 0.0, 128
        %552 = vxpose.xlu0.b32.end [16/16] 0.0, 128
        %v553 = vpop.trf.xlu0
        %v554 = vpop.trf.xlu0
        %v555 = vpop.trf.xlu0
        %v556 = vpop.trf.xlu0
        %v557 = vpop.trf.xlu0
        %v558 = vpop.trf.xlu0
        %v559 = vpop.trf.xlu0
        %v560 = vpop.trf.xlu0
        %v561 = vpop.trf.xlu0
        %v562 = vpop.trf.xlu0
        %v563 = vpop.trf.xlu0
        %v564 = vpop.trf.xlu0
        %v565 = vpop.trf.xlu0
        %v566 = vpop.trf.xlu0
        %v567 = vpop.trf.xlu0
        %v568 = vpop.trf.xlu0
        %v570 = vsel %vm313, %v553, 0
        %572 = vmatprep.subr.mxu0 %v404
        %573 = vmatpush1.msra.mxu0 %v402
        %574 = vmatprep.subr.mxu0 0.0
        %575 = vmatpush1.msra.mxu0 0.0
        %576 = vmatprep.subr.mxu0 0.0
        %577 = vmatpush1.msra.mxu0 0.0
        %578 = vmatprep.subr.mxu0 0.0
        %579 = vmatpush1.msra.mxu0 0.0
        %580 = vmatprep.subr.mxu0 0.0
        %581 = vmatpush1.msra.mxu0 0.0
        %582 = vmatprep.subr.mxu0 0.0
        %583 = vmatpush1.msra.mxu0 0.0
        %584 = vmatprep.subr.mxu0 0.0
        %585 = vmatpush1.msra.mxu0 0.0
        %586 = vmatprep.subr.mxu0 0.0
        %587 = vmatpush1.msra.mxu0 0.0
        %588 = vmatprep.subr.mxu0 0.0
        %589 = vmatpush1.msra.mxu0 0.0
        %590 = vmatprep.subr.mxu0 0.0
        %591 = vmatpush1.msra.mxu0 0.0
        %592 = vmatprep.subr.mxu0 0.0
        %593 = vmatpush1.msra.mxu0 0.0
        %594 = vmatprep.subr.mxu0 0.0
        %595 = vmatpush1.msra.mxu0 0.0
        %596 = vmatprep.subr.mxu0 0.0
        %597 = vmatpush1.msra.mxu0 0.0
        %598 = vmatprep.subr.mxu0 0.0
        %599 = vmatpush1.msra.mxu0 0.0
        %600 = vmatprep.subr.mxu0 0.0
        %601 = vmatpush1.msra.mxu0 0.0
        %602 = vmatprep.subr.mxu0 0.0
        %603 = vmatpush1.msra.mxu0 0.0
        %604 = vmatprep.subr.mxu0 0.0
        %605 = vmatpush1.msra.mxu0 0.0
        %606 = vmatprep.subr.mxu0 0.0
        %607 = vmatpush1.msra.mxu0 0.0
        %608 = vmatprep.subr.mxu0 0.0
        %609 = vmatpush1.msra.mxu0 0.0
        %610 = vmatprep.subr.mxu0 0.0
        %611 = vmatpush1.msra.mxu0 0.0
        %612 = vmatprep.subr.mxu0 0.0
        %613 = vmatpush1.msra.mxu0 0.0
        %614 = vmatprep.subr.mxu0 0.0
        %615 = vmatpush1.msra.mxu0 0.0
        %616 = vmatprep.subr.mxu0 0.0
        %617 = vmatpush1.msra.mxu0 0.0
        %618 = vmatprep.subr.mxu0 0.0
        %619 = vmatpush1.msra.mxu0 0.0
        %620 = vmatprep.subr.mxu0 0.0
        %621 = vmatpush1.msra.mxu0 0.0
        %622 = vmatprep.subr.mxu0 0.0
        %623 = vmatpush1.msra.mxu0 0.0
        %624 = vmatprep.subr.mxu0 0.0
        %625 = vmatpush1.msra.mxu0 0.0
        %626 = vmatprep.subr.mxu0 0.0
        %627 = vmatpush1.msra.mxu0 0.0
        %628 = vmatprep.subr.mxu0 0.0
        %629 = vmatpush1.msra.mxu0 0.0
        %630 = vmatprep.subr.mxu0 0.0
        %631 = vmatpush1.msra.mxu0 0.0
        %632 = vmatprep.subr.mxu0 0.0
        %633 = vmatpush1.msra.mxu0 0.0
        %634 = vmatprep.subr.mxu0 0.0
        %635 = vmatpush1.msra.mxu0 0.0
        %636 = vmatprep.mubr.f32.mxu0 0.0
        %637 = vmatmul.mubr.f32.gmra.mrb[0].mxu0 %v570
        %v638 = vpop.f32.mrb[0].mxu0
        %v639 = vadd.f32 0.0, %v638
        %v640 = vpop.f32.mrb[0].mxu0
        %v641 = vadd.f32 0.0, %v640
        %642 = vdwg.mxu0
        %v644 = vsel %vm313, %v256, 0
        %646 = vmatprep.subr.mxu0 %v641
        %647 = vmatpush1.msra.mxu0 %v639
        %648 = vmatprep.subr.mxu0 0.0
        %649 = vmatpush1.msra.mxu0 0.0
        %650 = vmatprep.subr.mxu0 0.0
        %651 = vmatpush1.msra.mxu0 0.0
        %652 = vmatprep.subr.mxu0 0.0
        %653 = vmatpush1.msra.mxu0 0.0
        %654 = vmatprep.subr.mxu0 0.0
        %655 = vmatpush1.msra.mxu0 0.0
        %656 = vmatprep.subr.mxu0 0.0
        %657 = vmatpush1.msra.mxu0 0.0
        %658 = vmatprep.subr.mxu0 0.0
        %659 = vmatpush1.msra.mxu0 0.0
        %660 = vmatprep.subr.mxu0 0.0
        %661 = vmatpush1.msra.mxu0 0.0
        %662 = vmatprep.subr.mxu0 0.0
        %663 = vmatpush1.msra.mxu0 0.0
        %664 = vmatprep.subr.mxu0 0.0
        %665 = vmatpush1.msra.mxu0 0.0
        %666 = vmatprep.subr.mxu0 0.0
        %667 = vmatpush1.msra.mxu0 0.0
        %668 = vmatprep.subr.mxu0 0.0
        %669 = vmatpush1.msra.mxu0 0.0
        %670 = vmatprep.subr.mxu0 0.0
        %671 = vmatpush1.msra.mxu0 0.0
        %672 = vmatprep.subr.mxu0 0.0
        %673 = vmatpush1.msra.mxu0 0.0
        %674 = vmatprep.subr.mxu0 0.0
        %675 = vmatpush1.msra.mxu0 0.0
        %676 = vmatprep.subr.mxu0 0.0
        %677 = vmatpush1.msra.mxu0 0.0
        %678 = vmatprep.subr.mxu0 0.0
        %679 = vmatpush1.msra.mxu0 0.0
        %680 = vmatprep.subr.mxu0 0.0
        %681 = vmatpush1.msra.mxu0 0.0
        %682 = vmatprep.subr.mxu0 0.0
        %683 = vmatpush1.msra.mxu0 0.0
        %684 = vmatprep.subr.mxu0 0.0
        %685 = vmatpush1.msra.mxu0 0.0
        %686 = vmatprep.subr.mxu0 0.0
        %687 = vmatpush1.msra.mxu0 0.0
        %688 = vmatprep.subr.mxu0 0.0
        %689 = vmatpush1.msra.mxu0 0.0
        %690 = vmatprep.subr.mxu0 0.0
        %691 = vmatpush1.msra.mxu0 0.0
        %692 = vmatprep.subr.mxu0 0.0
        %693 = vmatpush1.msra.mxu0 0.0
        %694 = vmatprep.subr.mxu0 0.0
        %695 = vmatpush1.msra.mxu0 0.0
        %696 = vmatprep.subr.mxu0 0.0
        %697 = vmatpush1.msra.mxu0 0.0
        %698 = vmatprep.subr.mxu0 0.0
        %699 = vmatpush1.msra.mxu0 0.0
        %700 = vmatprep.subr.mxu0 0.0
        %701 = vmatpush1.msra.mxu0 0.0
        %702 = vmatprep.subr.mxu0 0.0
        %703 = vmatpush1.msra.mxu0 0.0
        %704 = vmatprep.subr.mxu0 0.0
        %705 = vmatpush1.msra.mxu0 0.0
        %706 = vmatprep.subr.mxu0 0.0
        %707 = vmatpush1.msra.mxu0 0.0
        %708 = vmatprep.subr.mxu0 0.0
        %709 = vmatpush1.msra.mxu0 0.0
        %710 = vmatprep.mubr.f32.mxu0 0.0
        %711 = vmatmul.mubr.f32.gmra.mrb[0].mxu0 %v644
        %v712 = vpop.f32.mrb[0].mxu0
        %v713 = vadd.f32 %v258, %v712
        %v714 = vpop.f32.mrb[0].mxu0
        %v715 = vadd.f32 %v259, %v714
        %716 = vdwg.mxu0
        %717 = vst [vmem:[%s245] sm:$0xff] %v713
        %718 = vst [vmem:[%s245 + $0x8] sm:$0xff] %v715
        %s719 = sand.u32 %s160, 1
        %s720 = scalar_lea.sflag [#allocation4], %s719
        %s721 = sand.u32 %s160, 1
        %s722 = smul.addr %s721, 16
        %s723 = scalar_lea.vmem [#allocation3], %s722
        // Predicated region
        $region45: #{tpu_custom_call.1} parent=43 // pred_check
          %p724 = pneg %p170
        $region46: #{tpu_custom_call.1} parent=43 // pred_check_branch
          %726 = sbr.rel (%p724) target = $region48
        $region47: #{tpu_custom_call.1} parent=43 // pred_region
          %s728 = ssub.s32 256, 256
          %729 = vsyncadd %s720, %s728
          %s730 = smul.addr %s21, 2
          %s731 = smul.addr %s730, 128
          %s732 = scalar_lea.hbm %s6, %s731
          %s734 = sshll.u32 %s723, 4
          %s735 = int_to_ptr.vmem [resolvable:$true] %s734
          %737 = dma.vmem_to_hbm [thread:$0]  %s735, 256, %s732, %s720
        $region48: #{tpu_custom_call.1} parent=43 // pred_fallthru
          _
      $region44: #{tpu_custom_call.1} parent=5 // pred_fallthru
        _
      %p738 = scmp.le.s32.totalorder 2, %s16
      // Predicated region
      $region49: #{tpu_custom_call.1} parent=5 // pred_check
        %p739 = pneg %p738
      $region50: #{tpu_custom_call.1} parent=5 // pred_check_branch
        %741 = sbr.rel (%p739) target = $region52
      $region51: #{tpu_custom_call.1} parent=5 // pred_region
        %s742 = ssub.s32 %s16, 2
        // Predicated region
        $region53: #{tpu_custom_call.1} parent=51 // pred_check
          %p743 = pneg %p176
        $region54: #{tpu_custom_call.1} parent=51 // pred_check_branch
          %745 = sbr.rel (%p743) target = $region56
        $region55: #{tpu_custom_call.1} parent=51 // pred_region
          %s746 = sand.u32 %s161, 1
          %s747 = scalar_lea.sflag [#allocation4], %s746
          %s748 = sand.u32 %s161, 1
          %s749 = smul.addr %s748, 16
          %s750 = scalar_lea.vmem [#allocation3], %s749
          %751 = dma.done %s747, 256
        $region56: #{tpu_custom_call.1} parent=51 // pred_fallthru
          _
      $region52: #{tpu_custom_call.1} parent=5 // pred_fallthru
        _
    $region6: #{tpu_custom_call.1} parent=1 // loop_footer
      %s20 = sadd.s32 1, %s16
    $region7: #{tpu_custom_call.1} parent=1 // loop_footer_branch
      %15 = sbr.rel target = $region3
    $region8: #{tpu_custom_call.1} parent=1 // loop_exit
      _
    %752 = vsyncpa [#allocation4], 1
    %s753 = scalar_lea.sflag [#allocation4], 1
    %754 = vsyncpa %s753, 1

</llo_original>
